<compile_context>
chip_gen: v6e
topology: v6e:2x2x1
jax: 0.10.0
libtpu: 0.0.40
codegen_flags: <defaults>
</compile_context>

<pallas_src>
import functools
import math

import jax
import jax.numpy as jnp
from jax.experimental import pallas as pl
from jax.experimental.pallas import tpu as pltpu


_VMEM = pl.BlockSpec(memory_space=pltpu.MemorySpace.VMEM)


# ----------------------------------------------------------------------------
# helpers
# ----------------------------------------------------------------------------
def _pick_tile(dim, pref, align):
    """Largest tile <= pref that divides `dim` and is a multiple of `align`;
    falls back to the full dim (a full-extent block is always legal)."""
    if dim <= pref:
        return dim
    for t in range(pref, align - 1, -1):
        if dim % t == 0 and t % align == 0:
            return t
    return dim


# ----------------------------------------------------------------------------
# gridded bf16 matmul (stem conv via im2col, 1x1 shortcut convs, weight fold)
# ----------------------------------------------------------------------------
def _matmul_kernel(a_ref, b_ref, o_ref, acc_ref):
    @pl.when(pl.program_id(2) == 0)
    def _():
        acc_ref[...] = jnp.zeros_like(acc_ref)

    acc_ref[...] += jnp.dot(a_ref[...], b_ref[...],
                            preferred_element_type=jnp.float32)

    @pl.when(pl.program_id(2) == pl.num_programs(2) - 1)
    def _():
        o_ref[...] = acc_ref[...].astype(o_ref.dtype)


def pallas_matmul(a, b, out_dtype=jnp.float32):
    """a:(M,K) @ b:(K,N) with bf16 operands and f32 accumulation."""
    M, K = a.shape
    K2, N = b.shape
    assert K == K2
    a = a.astype(jnp.bfloat16)
    b = b.astype(jnp.bfloat16)
    tm = _pick_tile(M, 256, 16)
    tk = _pick_tile(K, 512, 128)
    tn = _pick_tile(N, 256, 128)
    grid = (M // tm, N // tn, K // tk)
    return pl.pallas_call(
        _matmul_kernel,
        out_shape=jax.ShapeDtypeStruct((M, N), out_dtype),
        grid_spec=pltpu.PrefetchScalarGridSpec(
            num_scalar_prefetch=0, grid=grid,
            in_specs=[pl.BlockSpec((tm, tk), lambda i, j, k: (i, k)),
                      pl.BlockSpec((tk, tn), lambda i, j, k: (k, j))],
            out_specs=pl.BlockSpec((tm, tn), lambda i, j, k: (i, j)),
            scratch_shapes=[pltpu.VMEM((tm, tn), jnp.float32)]),
        compiler_params=pltpu.CompilerParams(
            dimension_semantics=("parallel", "parallel", "arbitrary")),
    )(a, b)


# ----------------------------------------------------------------------------
# BatchNorm: gridded stats reduction -> (scale, shift); fused affine + ReLU
# ----------------------------------------------------------------------------
def _bn_stats_kernel(x_ref, g_ref, b_ref, scale_ref, shift_ref,
                     sum_ref, sq_ref, *, n_rows, eps):
    @pl.when(pl.program_id(0) == 0)
    def _():
        sum_ref[...] = jnp.zeros_like(sum_ref)
        sq_ref[...] = jnp.zeros_like(sq_ref)

    x = x_ref[...]
    sum_ref[...] += jnp.sum(x, axis=0, keepdims=True)
    sq_ref[...] += jnp.sum(x * x, axis=0, keepdims=True)

    @pl.when(pl.program_id(0) == pl.num_programs(0) - 1)
    def _():
        mean = sum_ref[...] / n_rows
        var = sq_ref[...] / n_rows - mean * mean     # biased (torch training BN)
        inv = jax.lax.rsqrt(var + eps)
        scale = g_ref[...] * inv
        scale_ref[...] = scale
        shift_ref[...] = b_ref[...] - mean * scale


def bn_stats(x_nhwc, gamma, beta, eps=1e-5):
    N, H, W, C = x_nhwc.shape
    R = N * H * W
    x2 = x_nhwc.reshape(R, C)
    tr = _pick_tile(R, 512, 8)
    kern = functools.partial(_bn_stats_kernel, n_rows=float(R), eps=eps)
    scale, shift = pl.pallas_call(
        kern,
        out_shape=(jax.ShapeDtypeStruct((1, C), jnp.float32),
                   jax.ShapeDtypeStruct((1, C), jnp.float32)),
        grid_spec=pltpu.PrefetchScalarGridSpec(
            num_scalar_prefetch=0, grid=(R // tr,),
            in_specs=[pl.BlockSpec((tr, C), lambda r: (r, 0)),
                      pl.BlockSpec((1, C), lambda r: (0, 0)),
                      pl.BlockSpec((1, C), lambda r: (0, 0))],
            out_specs=(pl.BlockSpec((1, C), lambda r: (0, 0)),
                       pl.BlockSpec((1, C), lambda r: (0, 0))),
            scratch_shapes=[pltpu.VMEM((1, C), jnp.float32),
                            pltpu.VMEM((1, C), jnp.float32)]),
        compiler_params=pltpu.CompilerParams(
            dimension_semantics=("arbitrary",)),
    )(x2, gamma, beta)
    return scale, shift


def _affine_relu_kernel(x_ref, s_ref, b_ref, o_ref):
    y = jnp.maximum(x_ref[...] * s_ref[...] + b_ref[...], 0.0)
    o_ref[...] = y.astype(o_ref.dtype)


def bn_apply_relu(x_nhwc, scale, shift, out_dtype):
    """y = relu(x*scale + shift), row-tiled; C=64 tensors are folded to 128
    lanes so the stores stay lane-dense (unmasked vst)."""
    N, H, W, C = x_nhwc.shape
    R = N * H * W
    x2 = x_nhwc.reshape(R, C)
    fold = 1
    if C < 128 and 128 % C == 0 and R % (128 // C) == 0:
        fold = 128 // C
    if fold > 1:
        x2 = x2.reshape(R // fold, C * fold)
        scale = jnp.tile(scale, (1, fold))
        shift = jnp.tile(shift, (1, fold))
    Rr, Cc = x2.shape
    tr = _pick_tile(Rr, 1024, 8)
    out = pl.pallas_call(
        _affine_relu_kernel,
        out_shape=jax.ShapeDtypeStruct((Rr, Cc), out_dtype),
        grid_spec=pltpu.PrefetchScalarGridSpec(
            num_scalar_prefetch=0, grid=(Rr // tr,),
            in_specs=[pl.BlockSpec((tr, Cc), lambda r: (r, 0)),
                      pl.BlockSpec((1, Cc), lambda r: (0, 0)),
                      pl.BlockSpec((1, Cc), lambda r: (0, 0))],
            out_specs=pl.BlockSpec((tr, Cc), lambda r: (r, 0))),
        compiler_params=pltpu.CompilerParams(
            dimension_semantics=("parallel",)),
    )(x2, scale, shift)
    return out.reshape(N, H, W, C)


# ----------------------------------------------------------------------------
# fused 3x3 conv kernel: 9 accumulated tap matmuls, optional residual add
# ----------------------------------------------------------------------------
def _conv3x3_kernel(x_ref, w_ref, *rest, stride, ho, wq, has_res):
    # x_ref: (P, Hq*Wq, Cin) bf16 polyphase planes, spatially flattened
    # w_ref: (9, Cin, co_tile) bf16
    # rest : [res_ref (ho*wq, co_tile) f32,] o_ref (ho*wq, co_tile) f32
    if has_res:
        res_ref, o_ref = rest
    else:
        (o_ref,) = rest
    rows = ho * wq
    acc = jnp.zeros((rows, w_ref.shape[-1]), jnp.float32)
    for i in range(3):
        for j in range(3):
            p = (i % stride) * stride + (j % stride)
            off = (i // stride) * wq + (j // stride)
            a = x_ref[p, off:off + rows, :]          # contiguous static window
            acc = acc + jnp.dot(a, w_ref[i * 3 + j],
                                preferred_element_type=jnp.float32)
    if has_res:
        acc = acc + res_ref[...]
    o_ref[...] = acc.astype(o_ref.dtype)


def conv3x3(y, w_taps, stride, residual=None):
    """3x3, padding=1 conv of bf16 NHWC `y` with pre-arranged (9, Cin, Cout)
    bf16 weights; optional fused residual add (f32 NHWC, output-shaped)."""
    N, H, W, C = y.shape
    Ho = (H + 2 - 3) // stride + 1
    Wo = (W + 2 - 3) // stride + 1
    Co = w_taps.shape[-1]

    # pad=1, then polyphase-split for stride 2 so each tap is a contiguous
    # window; one extra zero row keeps the last tap's window in range.
    xp = jnp.pad(y, ((0, 0), (1, 1), (1, 1), (0, 0)))
    if stride == 2:
        _, Hp, Wp, _ = xp.shape
        xp = jnp.pad(xp, ((0, 0), (0, (-Hp) % 2), (0, (-Wp) % 2), (0, 0)))
        xp = jnp.stack([xp[:, a::2, b::2, :]
                        for a in range(2) for b in range(2)], axis=1)
    else:
        xp = xp[:, None]
    xp = jnp.pad(xp, ((0, 0), (0, 0), (0, 1), (0, 0), (0, 0)))
    P, Hq, Wq = xp.shape[1], xp.shape[2], xp.shape[3]
    xp = xp.reshape(N, P, Hq * Wq, C)

    rows = Ho * Wq                       # "wide" rows (Wq-Wo garbage columns)
    co_tile = _pick_tile(Co, 256, 128)
    grid = (N, Co // co_tile)

    in_specs = [pl.BlockSpec((None, P, Hq * Wq, C), lambda n, co: (n, 0, 0, 0)),
                pl.BlockSpec((9, C, co_tile), lambda n, co: (0, 0, co))]
    args = [xp, w_taps.astype(jnp.bfloat16)]
    if residual is not None:
        res = jnp.pad(residual.astype(jnp.float32),
                      ((0, 0), (0, 0), (0, Wq - Wo), (0, 0)))
        args.append(res.reshape(N, rows, Co))
        in_specs.append(pl.BlockSpec((None, rows, co_tile),
                                     lambda n, co: (n, 0, co)))

    kern = functools.partial(_conv3x3_kernel, stride=stride, ho=Ho, wq=Wq,
                             has_res=residual is not None)
    out = pl.pallas_call(
        kern,
        out_shape=jax.ShapeDtypeStruct((N, rows, Co), jnp.float32),
        grid_spec=pltpu.PrefetchScalarGridSpec(
            num_scalar_prefetch=0, grid=grid,
            in_specs=in_specs,
            out_specs=pl.BlockSpec((None, rows, co_tile),
                                   lambda n, co: (n, 0, co))),
        compiler_params=pltpu.CompilerParams(
            dimension_semantics=("parallel", "parallel")),
    )(*args)
    # drop the Wq-Wo garbage columns introduced by the wide-row trick
    return out.reshape(N, Ho, Wq, Co)[:, :, :Wo, :]


# ----------------------------------------------------------------------------
# fused tail: global average pool + Linear(+bias)
# ----------------------------------------------------------------------------
def _pool_linear_kernel(x_ref, w_ref, b_ref, o_ref, *, inv_hw):
    pooled = jnp.sum(x_ref[...], axis=1) * inv_hw            # (N, C)
    o_ref[...] = (jnp.dot(pooled, w_ref[...],
                          preferred_element_type=jnp.float32) + b_ref[...])


def pool_linear(x_nhwc, w, b):
    N, H, W, C = x_nhwc.shape
    kern = functools.partial(_pool_linear_kernel, inv_hw=1.0 / float(H * W))
    return pl.pallas_call(
        kern,
        out_shape=jax.ShapeDtypeStruct((N, w.shape[1]), jnp.float32),
        in_specs=[_VMEM, _VMEM, _VMEM],
        out_specs=_VMEM,
    )(x_nhwc.reshape(N, H * W, C).astype(jnp.float32), w, b)


# ----------------------------------------------------------------------------
# stem 7x7 conv: im2col (one-time, stem only) + gridded matmul
# ----------------------------------------------------------------------------
def _im2col(x, kh, kw, stride, pad):
    x = jnp.pad(x, ((0, 0), (pad, pad), (pad, pad), (0, 0)))
    N, H, W, C = x.shape
    Ho = (H - kh) // stride + 1
    Wo = (W - kw) // stride + 1
    cols = [x[:, i:i + Ho * stride:stride, j:j + Wo * stride:stride, :]
            for i in range(kh) for j in range(kw)]
    return jnp.concatenate(cols, axis=-1), Ho, Wo


# ----------------------------------------------------------------------------
# parameters (weights stored pre-reshaped / pre-cast once)
# ----------------------------------------------------------------------------
def init_params(key, in_channels=3, num_classes=10):
    keys = iter(jax.random.split(key, 64))

    def xavier(k, shape, fan_in, fan_out):
        b = math.sqrt(6.0 / (fan_in + fan_out))
        return jax.random.uniform(k, shape, jnp.float32, -b, b)

    def conv_w(k, o, i, kh, kw):
        std = math.sqrt(2.0 / (i * kh * kw))
        return jax.random.normal(k, (o, i, kh, kw), jnp.float32) * std

    def taps(w_oihw):
        o, i, kh, kw = w_oihw.shape
        return (jnp.transpose(w_oihw, (2, 3, 1, 0))
                .reshape(kh * kw, i, o).astype(jnp.bfloat16))

    p = {}
    stem = xavier(next(keys), (64, in_channels, 7, 7), in_channels * 49, 64 * 49)
    p["stem_w"] = jnp.transpose(stem, (2, 3, 1, 0)).reshape(49 * in_channels, 64)
    p["proj"] = {"0": jax.random.normal(next(keys), (64, 64), jnp.float32) * 0.125}
    p["bn1_g"] = jnp.ones((1, 64), jnp.float32)
    p["bn1_b"] = jnp.zeros((1, 64), jnp.float32)

    def make_block(in_p, planes, stride):
        blk = {"stride": stride, "has_shortcut": (stride != 1 or in_p != planes)}
        blk["bn1_g"] = jnp.ones((1, in_p), jnp.float32)
        blk["bn1_b"] = jnp.zeros((1, in_p), jnp.float32)
        blk["conv1_w"] = taps(conv_w(next(keys), planes, in_p, 3, 3))
        blk["bn2_g"] = jnp.ones((1, planes), jnp.float32)
        blk["bn2_b"] = jnp.zeros((1, planes), jnp.float32)
        blk["conv2_w"] = taps(conv_w(next(keys), planes, planes, 3, 3))
        if blk["has_shortcut"]:
            w = conv_w(next(keys), planes, in_p, 1, 1).reshape(planes, in_p)
            blk["shortcut_w"] = jnp.transpose(w).astype(jnp.bfloat16)  # (in, out)
        return blk

    in_p = 64
    for name, planes, stride in [("stage1", 64, 1), ("stage2", 128, 2),
                                 ("stage3", 256, 2), ("stage4", 512, 2)]:
        blocks = []
        for s in [stride, 1]:                       # num_blocks = [2, 2, 2, 2]
            blocks.append(make_block(in_p, planes, s))
            in_p = planes
        p[name] = blocks

    p["last_w"] = jnp.transpose(
        xavier(next(keys), (num_classes, 512), 512, num_classes))   # (512, nc)
    p["last_b"] = jnp.full((1, num_classes), 0.1, jnp.float32)
    return p


# ----------------------------------------------------------------------------
# forward pass
# ----------------------------------------------------------------------------
def preact_block_forward(x, blk):
    # x: f32 NHWC block input
    s1, b1 = bn_stats(x, blk["bn1_g"], blk["bn1_b"])
    y1 = bn_apply_relu(x, s1, b1, out_dtype=jnp.bfloat16)
    stride = blk["stride"]

    if blk["has_shortcut"]:
        ys = y1[:, ::stride, ::stride, :] if stride > 1 else y1
        Nb, Hs, Ws, Ci = ys.shape
        Co = blk["shortcut_w"].shape[-1]
        sc = pallas_matmul(ys.reshape(Nb * Hs * Ws, Ci), blk["shortcut_w"])
        shortcut = sc.reshape(Nb, Hs, Ws, Co)
    else:
        shortcut = x

    z = conv3x3(y1, blk["conv1_w"], stride=stride)
    s2, b2 = bn_stats(z, blk["bn2_g"], blk["bn2_b"])
    y2 = bn_apply_relu(z, s2, b2, out_dtype=jnp.bfloat16)
    # residual add fused into the conv2 kernel epilogue
    return conv3x3(y2, blk["conv2_w"], stride=1, residual=shortcut)


def preact_resnet_proj_forward(x_nchw, task, params):
    key = str(int(task[0]))
    x = jnp.transpose(x_nchw, (0, 2, 3, 1)).astype(jnp.float32)   # NCHW -> NHWC
    N = x.shape[0]

    # Stem 7x7/s1/p1 conv and the per-task feature projection are both linear
    # in the channel dim: patches @ (W_stem @ proj) == feature_proj(conv1(x)).
    w_stem = pallas_matmul(params["stem_w"], params["proj"][key])   # (49*Cin, 64)
    patches, Ho, Wo = _im2col(x, 7, 7, stride=1, pad=1)
    out = pallas_matmul(patches.reshape(N * Ho * Wo, -1), w_stem)
    out = out.reshape(N, Ho, Wo, 64)

    s, b = bn_stats(out, params["bn1_g"], params["bn1_b"])
    out = bn_apply_relu(out, s, b, out_dtype=jnp.float32)

    for stage in ("stage1", "stage2", "stage3", "stage4"):
        for blk in params[stage]:
            out = preact_block_forward(out, blk)

    # fused global average pool + classifier (bias 0.1)
    return pool_linear(out, params["last_w"], params["last_b"])


# ----------------------------------------------------------------------------
if __name__ == "__main__":
    key = jax.random.PRNGKey(0)
    pkey, xkey = jax.random.split(key)
    params = init_params(pkey, in_channels=3, num_classes=10)

    x = jax.random.normal(xkey, (2, 3, 16, 16), jnp.float32)   # NCHW like torch
    task = jnp.zeros((1,), jnp.int32)

    logits = preact_resnet_proj_forward(x, task, params)
    logits = jax.block_until_ready(logits)
    assert logits.shape == (2, 10)
    assert bool(jnp.all(jnp.isfinite(logits)))
    print("KERNEL_OK")
</pallas_src>

<mosaic_0001>
module attributes {stable_mosaic.version = 11 : i64} {
  func.func @_matmul_kernel(%arg0: i32, %arg1: i32, %arg2: i32, %arg3: memref<147x64xbf16, #tpu.memory_space<vmem>>, %arg4: memref<64x64xbf16, #tpu.memory_space<vmem>>, %arg5: memref<147x64xf32, #tpu.memory_space<vmem>>, %arg6: memref<147x64xf32, #tpu.memory_space<vmem>>) attributes {dimension_semantics = [#tpu.dimension_semantics<parallel>, #tpu.dimension_semantics<parallel>, #tpu.dimension_semantics<arbitrary>], iteration_bounds = array<i64: 1, 1, 1>, scalar_prefetch = 0 : i64, scratch_operands = 1 : i64, tpu.core_type = #tpu.core_type<tc>, window_params = [{transform_indices = @transform_0, window_bounds = array<i64: 147, 64>}, {transform_indices = @transform_1, window_bounds = array<i64: 64, 64>}, {transform_indices = @transform_2, window_bounds = array<i64: 147, 64>}]} {
    %c0_i32 = arith.constant 0 : i32
    %0 = arith.cmpi eq, %arg2, %c0_i32 : i32
    %1 = arith.extui %0 : i1 to i32
    %c0_i32_0 = arith.constant 0 : i32
    %2 = arith.cmpi ne, %1, %c0_i32_0 : i32
    scf.if %2 {
      %cst_10 = arith.constant 0.000000e+00 : f32
      %12 = vector.broadcast %cst_10 : f32 to vector<147x64xf32>
      %c0_11 = arith.constant 0 : index
      %c0_12 = arith.constant 0 : index
      %13 = vector.load %arg6[%c0_11, %c0_12] : memref<147x64xf32, #tpu.memory_space<vmem>>, vector<147x64xf32>
      tpu.vector_store %arg6[%c0_11, %c0_12], %12 {strides = array<i32>} : memref<147x64xf32, #tpu.memory_space<vmem>>, vector<147x64xf32>,
    } else {
    }
    %c0 = arith.constant 0 : index
    %c0_1 = arith.constant 0 : index
    %3 = vector.load %arg6[%c0, %c0_1] : memref<147x64xf32, #tpu.memory_space<vmem>>, vector<147x64xf32>
    %c0_2 = arith.constant 0 : index
    %c0_3 = arith.constant 0 : index
    %4 = vector.load %arg3[%c0_2, %c0_3] : memref<147x64xbf16, #tpu.memory_space<vmem>>, vector<147x64xbf16>
    %c0_4 = arith.constant 0 : index
    %c0_5 = arith.constant 0 : index
    %5 = vector.load %arg4[%c0_4, %c0_5] : memref<64x64xbf16, #tpu.memory_space<vmem>>, vector<64x64xbf16>
    %cst = arith.constant dense<0.000000e+00> : vector<147x64xf32>
    %6 = tpu.matmul %4, %5, %cst {dimension_numbers = #tpu.dot_dimension_numbers<[1], [0], [0], [1], [0, 0, 1, 1], [], []>} : vector<147x64xbf16>, vector<64x64xbf16>, vector<147x64xf32> -> vector<147x64xf32>
    %7 = arith.addf %3, %6 : vector<147x64xf32>
    %c0_6 = arith.constant 0 : index
    %c0_7 = arith.constant 0 : index
    %8 = vector.load %arg6[%c0_6, %c0_7] : memref<147x64xf32, #tpu.memory_space<vmem>>, vector<147x64xf32>
    tpu.vector_store %arg6[%c0_6, %c0_7], %7 {strides = array<i32>} : memref<147x64xf32, #tpu.memory_space<vmem>>, vector<147x64xf32>,
    %c0_i32_8 = arith.constant 0 : i32
    %9 = arith.cmpi eq, %arg2, %c0_i32_8 : i32
    %10 = arith.extui %9 : i1 to i32
    %c0_i32_9 = arith.constant 0 : i32
    %11 = arith.cmpi ne, %10, %c0_i32_9 : i32
    scf.if %11 {
      %c0_10 = arith.constant 0 : index
      %c0_11 = arith.constant 0 : index
      %12 = vector.load %arg6[%c0_10, %c0_11] : memref<147x64xf32, #tpu.memory_space<vmem>>, vector<147x64xf32>
      %c0_12 = arith.constant 0 : index
      %c0_13 = arith.constant 0 : index
      %13 = vector.load %arg5[%c0_12, %c0_13] : memref<147x64xf32, #tpu.memory_space<vmem>>, vector<147x64xf32>
      tpu.vector_store %arg5[%c0_12, %c0_13], %12 {strides = array<i32>} : memref<147x64xf32, #tpu.memory_space<vmem>>, vector<147x64xf32>,
    } else {
    }
    return
  }
  func.func @transform_0(%arg0: i32, %arg1: i32, %arg2: i32) -> (i32, i32) {
    %c0_i32 = arith.constant 0 : i32
    return %arg0, %arg2 : i32, i32
  }
  func.func @transform_1(%arg0: i32, %arg1: i32, %arg2: i32) -> (i32, i32) {
    %c0_i32 = arith.constant 0 : i32
    return %arg2, %arg1 : i32, i32
  }
  func.func @transform_2(%arg0: i32, %arg1: i32, %arg2: i32) -> (i32, i32) {
    %c0_i32 = arith.constant 0 : i32
    return %arg0, %arg1 : i32, i32
  }
}

</mosaic_0001>

<llo_original>
// kernel: tpu_custom_call.1
$region0: #{tpu_custom_call.1}
  #allocation0 [shape = 'u32[]', space=smem, size = 0x4, offset = 0x4, fixed_abs, tag = 'smem constant byte address 0x4 - core index']
  #allocation1 [shape = 'u32[144,128]{1,0:T(1,128)}', space=vmem, size = 0x12000, scoped, tag = 'internal scratch']
  #allocation2 [shape = 'f32[147,64]{1,0:T(8,128)}', space=vmem, size = 0x13000, scoped, tag = 'scratch operand']
  %s0 = inlined_call_operand.vmem [shape: bf16[147,64], index: 0, kind: input, shape index: {}]
  %s1 = inlined_call_operand.vmem [shape: bf16[64,64], index: 1, kind: input, shape index: {}]
  %s2 = inlined_call_operand.vmem [shape: f32[147,64], index: 2, kind: output, shape index: {}]
  %s3 = sld [smem:[#allocation0]]
  $region26: #{tpu_custom_call.1} parent=0
    _
  %s5 = ssub.s32 1, %s3
  %s6 = scalar_select 0, %s5, %s3
  // Predicated region
  $region2: #{tpu_custom_call.1} parent=0 // pred_check
    _
  $region3: #{tpu_custom_call.1} parent=0 // pred_check_branch
    %8 = sbr.rel (0) target = $region5
  $region4: #{tpu_custom_call.1} parent=0 // pred_region
    _
  $region5: #{tpu_custom_call.1} parent=0 // pred_fallthru
    _
  // Predicated region
  $region6: #{tpu_custom_call.1} parent=0 // pred_check
    _
  $region7: #{tpu_custom_call.1} parent=0 // pred_check_branch
    %10 = sbr.rel (0) target = $region9
  $region8: #{tpu_custom_call.1} parent=0 // pred_region
    _
  $region9: #{tpu_custom_call.1} parent=0 // pred_fallthru
    _
  %p12 = scmp.eq.s32.totalorder 0, 0
  // Predicated region
  $region10: #{tpu_custom_call.1} parent=0 // pred_check
    %p13 = pneg %p12
  $region11: #{tpu_custom_call.1} parent=0 // pred_check_branch
    %15 = sbr.rel (%p13) target = $region13
  $region12: #{tpu_custom_call.1} parent=0 // pred_region
    %vm16 = vcmask 523264
    %17 = vst.msk [vmem:[#allocation2] sm:$0xff] %vm16, 0.0
    %18 = vst.msk [vmem:[#allocation2 + $0x8] sm:$0xff] %vm16, 0.0
    %19 = vst.msk [vmem:[#allocation2 + $0x10] sm:$0xff] %vm16, 0.0
    %20 = vst.msk [vmem:[#allocation2 + $0x18] sm:$0xff] %vm16, 0.0
    %21 = vst.msk [vmem:[#allocation2 + $0x20] sm:$0xff] %vm16, 0.0
    %22 = vst.msk [vmem:[#allocation2 + $0x28] sm:$0xff] %vm16, 0.0
    %23 = vst.msk [vmem:[#allocation2 + $0x30] sm:$0xff] %vm16, 0.0
    %24 = vst.msk [vmem:[#allocation2 + $0x38] sm:$0xff] %vm16, 0.0
    %25 = vst.msk [vmem:[#allocation2 + $0x40] sm:$0xff] %vm16, 0.0
    %26 = vst.msk [vmem:[#allocation2 + $0x48] sm:$0xff] %vm16, 0.0
    %27 = vst.msk [vmem:[#allocation2 + $0x50] sm:$0xff] %vm16, 0.0
    %28 = vst.msk [vmem:[#allocation2 + $0x58] sm:$0xff] %vm16, 0.0
    %29 = vst.msk [vmem:[#allocation2 + $0x60] sm:$0xff] %vm16, 0.0
    %30 = vst.msk [vmem:[#allocation2 + $0x68] sm:$0xff] %vm16, 0.0
    %31 = vst.msk [vmem:[#allocation2 + $0x70] sm:$0xff] %vm16, 0.0
    %32 = vst.msk [vmem:[#allocation2 + $0x78] sm:$0xff] %vm16, 0.0
    %33 = vst.msk [vmem:[#allocation2 + $0x80] sm:$0xff] %vm16, 0.0
    %34 = vst.msk [vmem:[#allocation2 + $0x88] sm:$0xff] %vm16, 0.0
    %vm35 = vcmask 518144
    %36 = vst.msk [vmem:[#allocation2 + $0x90] sm:$0x7] %vm35, 0.0
  $region13: #{tpu_custom_call.1} parent=0 // pred_fallthru
    _
  %v37 = vld [vmem:[#allocation2] sm:$0xff]
  %v38 = vld [vmem:[#allocation2 + $0x8] sm:$0xff]
  %v39 = vld [vmem:[#allocation2 + $0x10] sm:$0xff]
  %v40 = vld [vmem:[#allocation2 + $0x18] sm:$0xff]
  %v41 = vld [vmem:[#allocation2 + $0x20] sm:$0xff]
  %v42 = vld [vmem:[#allocation2 + $0x28] sm:$0xff]
  %v43 = vld [vmem:[#allocation2 + $0x30] sm:$0xff]
  %v44 = vld [vmem:[#allocation2 + $0x38] sm:$0xff]
  %v45 = vld [vmem:[#allocation2 + $0x40] sm:$0xff]
  %v46 = vld [vmem:[#allocation2 + $0x48] sm:$0xff]
  %v47 = vld [vmem:[#allocation2 + $0x50] sm:$0xff]
  %v48 = vld [vmem:[#allocation2 + $0x58] sm:$0xff]
  %v49 = vld [vmem:[#allocation2 + $0x60] sm:$0xff]
  %v50 = vld [vmem:[#allocation2 + $0x68] sm:$0xff]
  %v51 = vld [vmem:[#allocation2 + $0x70] sm:$0xff]
  %v52 = vld [vmem:[#allocation2 + $0x78] sm:$0xff]
  %v53 = vld [vmem:[#allocation2 + $0x80] sm:$0xff]
  %v54 = vld [vmem:[#allocation2 + $0x88] sm:$0xff]
  %v55 = vld [vmem:[#allocation2 + $0x90] sm:$0x7]
  %v56 = vld [vmem:[%s0] sm:$0xf]
  %v57 = vld [vmem:[%s0 + $0x4] sm:$0xf]
  %v58 = vld [vmem:[%s0 + $0x8] sm:$0xf]
  %v59 = vld [vmem:[%s0 + $0xc] sm:$0xf]
  %v60 = vld [vmem:[%s0 + $0x10] sm:$0xf]
  %v61 = vld [vmem:[%s0 + $0x14] sm:$0xf]
  %v62 = vld [vmem:[%s0 + $0x18] sm:$0xf]
  %v63 = vld [vmem:[%s0 + $0x1c] sm:$0xf]
  %v64 = vld [vmem:[%s0 + $0x20] sm:$0xf]
  %v65 = vld [vmem:[%s0 + $0x24] sm:$0xf]
  %v66 = vld [vmem:[%s0 + $0x28] sm:$0xf]
  %v67 = vld [vmem:[%s0 + $0x2c] sm:$0xf]
  %v68 = vld [vmem:[%s0 + $0x30] sm:$0xf]
  %v69 = vld [vmem:[%s0 + $0x34] sm:$0xf]
  %v70 = vld [vmem:[%s0 + $0x38] sm:$0xf]
  %v71 = vld [vmem:[%s0 + $0x3c] sm:$0xf]
  %v72 = vld [vmem:[%s0 + $0x40] sm:$0xf]
  %v73 = vld [vmem:[%s0 + $0x44] sm:$0xf]
  %v74 = vld [vmem:[%s0 + $0x48] sm:$0x3]
  %v75 = vld [vmem:[%s1] sm:$0xf]
  %v76 = vld [vmem:[%s1 + $0x4] sm:$0xf]
  %v77 = vld [vmem:[%s1 + $0x8] sm:$0xf]
  %v78 = vld [vmem:[%s1 + $0xc] sm:$0xf]
  %v79 = vld [vmem:[%s1 + $0x10] sm:$0xf]
  %v80 = vld [vmem:[%s1 + $0x14] sm:$0xf]
  %v81 = vld [vmem:[%s1 + $0x18] sm:$0xf]
  %v82 = vld [vmem:[%s1 + $0x1c] sm:$0xf]
  %v102 = vunpack.c.l.b16 %v56
  %v103 = vunpack.c.l.b16 %v57
  %v104 = vunpack.c.l.b16 %v58
  %v105 = vunpack.c.l.b16 %v59
  %v106 = vunpack.c.l.b16 %v60
  %v107 = vunpack.c.l.b16 %v61
  %v108 = vunpack.c.l.b16 %v62
  %v109 = vunpack.c.l.b16 %v63
  %v110 = vunpack.c.l.b16 %v64
  %v111 = vunpack.c.l.b16 %v65
  %v112 = vunpack.c.l.b16 %v66
  %v113 = vunpack.c.l.b16 %v67
  %v114 = vunpack.c.l.b16 %v68
  %v115 = vunpack.c.l.b16 %v69
  %v116 = vunpack.c.l.b16 %v70
  %v117 = vunpack.c.l.b16 %v71
  %v118 = vunpack.c.l.b16 %v72
  %v119 = vunpack.c.l.b16 %v73
  %v120 = vunpack.c.l.b16 %v74
  %v121 = vpack.c.b16 %v103, %v102
  %v122 = vpack.c.b16 %v105, %v104
  %v123 = vpack.c.b16 %v107, %v106
  %v124 = vpack.c.b16 %v109, %v108
  %v125 = vpack.c.b16 %v111, %v110
  %v126 = vpack.c.b16 %v113, %v112
  %v127 = vpack.c.b16 %v115, %v114
  %v128 = vpack.c.b16 %v117, %v116
  %v129 = vpack.c.b16 %v119, %v118
  %v130 = vpack.c.b16 %v120, %v120
  %v139 = vunpack.c.l.b16 %v75
  %v140 = vunpack.c.l.b16 %v76
  %v141 = vunpack.c.l.b16 %v77
  %v142 = vunpack.c.l.b16 %v78
  %v143 = vunpack.c.l.b16 %v79
  %v144 = vunpack.c.l.b16 %v80
  %v145 = vunpack.c.l.b16 %v81
  %v146 = vunpack.c.l.b16 %v82
  %v147 = vpack.c.b16 %v140, %v139
  %v148 = vpack.c.b16 %v142, %v141
  %v149 = vpack.c.b16 %v144, %v143
  %v150 = vpack.c.b16 %v146, %v145
  %vm155 = vcmask 523264
  %v157 = vsel %vm155, %v121, 0
  %v160 = vsel %vm155, %v122, 0
  %v163 = vsel %vm155, %v123, 0
  %v166 = vsel %vm155, %v124, 0
  %v169 = vsel %vm155, %v125, 0
  %v172 = vsel %vm155, %v126, 0
  %v175 = vsel %vm155, %v127, 0
  %v178 = vsel %vm155, %v128, 0
  %v181 = vsel %vm155, %v129, 0
  %v184 = vsel %vm155, %v130, 0
  %186 = vmatprep.subr.bf16.mxu0 0
  %187 = vmatpush1.bf16.msra.mxu0 0
  %188 = vmatprep.subr.bf16.mxu0 0
  %189 = vmatpush1.bf16.msra.mxu0 0
  %190 = vmatprep.subr.bf16.mxu0 0
  %191 = vmatpush1.bf16.msra.mxu0 0
  %192 = vmatprep.subr.bf16.mxu0 0
  %193 = vmatpush1.bf16.msra.mxu0 0
  %194 = vmatprep.subr.bf16.mxu0 0
  %195 = vmatpush1.bf16.msra.mxu0 %v150
  %196 = vmatprep.subr.bf16.mxu0 0
  %197 = vmatpush1.bf16.msra.mxu0 %v149
  %198 = vmatprep.subr.bf16.mxu0 0
  %199 = vmatpush1.bf16.msra.mxu0 %v148
  %200 = vmatprep.subr.bf16.mxu0 0
  %201 = vmatpush1.bf16.msra.mxu0 %v147
  %202 = vmatprep.subr.bf16.mxu0 0
  %203 = vmatpush2.bf16.msra.mxu0 0
  %204 = vmatprep.subr.bf16.mxu0 0
  %205 = vmatpush2.bf16.msra.mxu0 0
  %206 = vmatprep.subr.bf16.mxu0 0
  %207 = vmatpush2.bf16.msra.mxu0 0
  %208 = vmatprep.subr.bf16.mxu0 0
  %209 = vmatpush2.bf16.msra.mxu0 0
  %210 = vmatprep.subr.bf16.mxu0 0
  %211 = vmatpush2.bf16.msra.mxu0 0
  %212 = vmatprep.subr.bf16.mxu0 0
  %213 = vmatpush2.bf16.msra.mxu0 0
  %214 = vmatprep.subr.bf16.mxu0 0
  %215 = vmatpush2.bf16.msra.mxu0 0
  %216 = vmatprep.subr.bf16.mxu0 0
  %217 = vmatpush2.bf16.msra.mxu0 0
  %218 = vmatprep.mubr.bf16.mxu0 0
  %219 = vmatmul.mubr.bf16.gmra.mxu0 %v157
  %v220 = vpop.f32.mrf.mxu0
  %v221 = vadd.f32 0.0, %v220
  %v222 = vpop.f32.mrf.mxu0
  %v223 = vpop.f32.mrf.mxu0
  %v224 = vadd.f32 0.0, %v223
  %v225 = vpop.f32.mrf.mxu0
  %226 = vmatprep.mubr.bf16.mxu0 0
  %227 = vmatmul.mubr.bf16.gmra.mxu0 %v160
  %v228 = vpop.f32.mrf.mxu0
  %v229 = vadd.f32 0.0, %v228
  %v230 = vpop.f32.mrf.mxu0
  %v231 = vpop.f32.mrf.mxu0
  %v232 = vadd.f32 0.0, %v231
  %v233 = vpop.f32.mrf.mxu0
  %234 = vmatprep.mubr.bf16.mxu0 0
  %235 = vmatmul.mubr.bf16.gmra.mxu0 %v163
  %v236 = vpop.f32.mrf.mxu0
  %v237 = vadd.f32 0.0, %v236
  %v238 = vpop.f32.mrf.mxu0
  %v239 = vpop.f32.mrf.mxu0
  %v240 = vadd.f32 0.0, %v239
  %v241 = vpop.f32.mrf.mxu0
  %242 = vmatprep.mubr.bf16.mxu0 0
  %243 = vmatmul.mubr.bf16.gmra.mxu0 %v166
  %v244 = vpop.f32.mrf.mxu0
  %v245 = vadd.f32 0.0, %v244
  %v246 = vpop.f32.mrf.mxu0
  %v247 = vpop.f32.mrf.mxu0
  %v248 = vadd.f32 0.0, %v247
  %v249 = vpop.f32.mrf.mxu0
  %250 = vmatprep.mubr.bf16.mxu0 0
  %251 = vmatmul.mubr.bf16.gmra.mxu0 %v169
  %v252 = vpop.f32.mrf.mxu0
  %v253 = vadd.f32 0.0, %v252
  %v254 = vpop.f32.mrf.mxu0
  %v255 = vpop.f32.mrf.mxu0
  %v256 = vadd.f32 0.0, %v255
  %v257 = vpop.f32.mrf.mxu0
  %258 = vmatprep.mubr.bf16.mxu0 0
  %259 = vmatmul.mubr.bf16.gmra.mxu0 %v172
  %v260 = vpop.f32.mrf.mxu0
  %v261 = vadd.f32 0.0, %v260
  %v262 = vpop.f32.mrf.mxu0
  %v263 = vpop.f32.mrf.mxu0
  %v264 = vadd.f32 0.0, %v263
  %v265 = vpop.f32.mrf.mxu0
  %266 = vmatprep.mubr.bf16.mxu0 0
  %267 = vmatmul.mubr.bf16.gmra.mxu0 %v175
  %v268 = vpop.f32.mrf.mxu0
  %v269 = vadd.f32 0.0, %v268
  %v270 = vpop.f32.mrf.mxu0
  %v271 = vpop.f32.mrf.mxu0
  %v272 = vadd.f32 0.0, %v271
  %v273 = vpop.f32.mrf.mxu0
  %274 = vmatprep.mubr.bf16.mxu0 0
  %275 = vmatmul.mubr.bf16.gmra.mxu0 %v178
  %v276 = vpop.f32.mrf.mxu0
  %v277 = vadd.f32 0.0, %v276
  %v278 = vpop.f32.mrf.mxu0
  %v279 = vpop.f32.mrf.mxu0
  %v280 = vadd.f32 0.0, %v279
  %v281 = vpop.f32.mrf.mxu0
  %282 = vmatprep.mubr.bf16.mxu0 0
  %283 = vmatmul.mubr.bf16.gmra.mxu0 %v181
  %v284 = vpop.f32.mrf.mxu0
  %v285 = vadd.f32 0.0, %v284
  %v286 = vpop.f32.mrf.mxu0
  %v287 = vpop.f32.mrf.mxu0
  %v288 = vadd.f32 0.0, %v287
  %v289 = vpop.f32.mrf.mxu0
  %290 = vmatprep.mubr.bf16.mxu0 0
  %291 = vmatmul.mubr.bf16.gmra.mxu0 %v184
  %v292 = vpop.f32.mrf.mxu0
  %v293 = vadd.f32 0.0, %v292
  %v294 = vpop.f32.mrf.mxu0
  %v295 = vpop.f32.mrf.mxu0
  %v296 = vpop.f32.mrf.mxu0
  %297 = vdwg.mxu0
  %v298 = vadd.f32 %v37, %v221
  %v299 = vadd.f32 %v38, %v224
  %v300 = vadd.f32 %v39, %v229
  %v301 = vadd.f32 %v40, %v232
  %v302 = vadd.f32 %v41, %v237
  %v303 = vadd.f32 %v42, %v240
  %v304 = vadd.f32 %v43, %v245
  %v305 = vadd.f32 %v44, %v248
  %v306 = vadd.f32 %v45, %v253
  %v307 = vadd.f32 %v46, %v256
  %v308 = vadd.f32 %v47, %v261
  %v309 = vadd.f32 %v48, %v264
  %v310 = vadd.f32 %v49, %v269
  %v311 = vadd.f32 %v50, %v272
  %v312 = vadd.f32 %v51, %v277
  %v313 = vadd.f32 %v52, %v280
  %v314 = vadd.f32 %v53, %v285
  %v315 = vadd.f32 %v54, %v288
  %v316 = vadd.f32 %v55, %v293
  %317 = vst.msk [vmem:[#allocation2] sm:$0xff] %vm155, %v298
  %318 = vst.msk [vmem:[#allocation2 + $0x8] sm:$0xff] %vm155, %v299
  %319 = vst.msk [vmem:[#allocation2 + $0x10] sm:$0xff] %vm155, %v300
  %320 = vst.msk [vmem:[#allocation2 + $0x18] sm:$0xff] %vm155, %v301
  %321 = vst.msk [vmem:[#allocation2 + $0x20] sm:$0xff] %vm155, %v302
  %322 = vst.msk [vmem:[#allocation2 + $0x28] sm:$0xff] %vm155, %v303
  %323 = vst.msk [vmem:[#allocation2 + $0x30] sm:$0xff] %vm155, %v304
  %324 = vst.msk [vmem:[#allocation2 + $0x38] sm:$0xff] %vm155, %v305
  %325 = vst.msk [vmem:[#allocation2 + $0x40] sm:$0xff] %vm155, %v306
  %326 = vst.msk [vmem:[#allocation2 + $0x48] sm:$0xff] %vm155, %v307
  %327 = vst.msk [vmem:[#allocation2 + $0x50] sm:$0xff] %vm155, %v308
  %328 = vst.msk [vmem:[#allocation2 + $0x58] sm:$0xff] %vm155, %v309
  %329 = vst.msk [vmem:[#allocation2 + $0x60] sm:$0xff] %vm155, %v310
  %330 = vst.msk [vmem:[#allocation2 + $0x68] sm:$0xff] %vm155, %v311
  %331 = vst.msk [vmem:[#allocation2 + $0x70] sm:$0xff] %vm155, %v312
  %332 = vst.msk [vmem:[#allocation2 + $0x78] sm:$0xff] %vm155, %v313
  %333 = vst.msk [vmem:[#allocation2 + $0x80] sm:$0xff] %vm155, %v314
  %334 = vst.msk [vmem:[#allocation2 + $0x88] sm:$0xff] %vm155, %v315
  %vm335 = vcmask 518144
  %336 = vst.msk [vmem:[#allocation2 + $0x90] sm:$0x7] %vm335, %v316
  // Predicated region
  $region14: #{tpu_custom_call.1} parent=0 // pred_check
    %p337 = pneg %p12
  $region15: #{tpu_custom_call.1} parent=0 // pred_check_branch
    %339 = sbr.rel (%p337) target = $region17
  $region16: #{tpu_custom_call.1} parent=0 // pred_region
    %v340 = vld [vmem:[#allocation2] sm:$0xff]
    %v341 = vld [vmem:[#allocation2 + $0x8] sm:$0xff]
    %v342 = vld [vmem:[#allocation2 + $0x10] sm:$0xff]
    %v343 = vld [vmem:[#allocation2 + $0x18] sm:$0xff]
    %v344 = vld [vmem:[#allocation2 + $0x20] sm:$0xff]
    %v345 = vld [vmem:[#allocation2 + $0x28] sm:$0xff]
    %v346 = vld [vmem:[#allocation2 + $0x30] sm:$0xff]
    %v347 = vld [vmem:[#allocation2 + $0x38] sm:$0xff]
    %v348 = vld [vmem:[#allocation2 + $0x40] sm:$0xff]
    %v349 = vld [vmem:[#allocation2 + $0x48] sm:$0xff]
    %v350 = vld [vmem:[#allocation2 + $0x50] sm:$0xff]
    %v351 = vld [vmem:[#allocation2 + $0x58] sm:$0xff]
    %v352 = vld [vmem:[#allocation2 + $0x60] sm:$0xff]
    %v353 = vld [vmem:[#allocation2 + $0x68] sm:$0xff]
    %v354 = vld [vmem:[#allocation2 + $0x70] sm:$0xff]
    %v355 = vld [vmem:[#allocation2 + $0x78] sm:$0xff]
    %v356 = vld [vmem:[#allocation2 + $0x80] sm:$0xff]
    %v357 = vld [vmem:[#allocation2 + $0x88] sm:$0xff]
    %v358 = vld [vmem:[#allocation2 + $0x90] sm:$0x7]
    %359 = vst.msk [vmem:[%s2] sm:$0xff] %vm155, %v340
    %360 = vst.msk [vmem:[%s2 + $0x8] sm:$0xff] %vm155, %v341
    %361 = vst.msk [vmem:[%s2 + $0x10] sm:$0xff] %vm155, %v342
    %362 = vst.msk [vmem:[%s2 + $0x18] sm:$0xff] %vm155, %v343
    %363 = vst.msk [vmem:[%s2 + $0x20] sm:$0xff] %vm155, %v344
    %364 = vst.msk [vmem:[%s2 + $0x28] sm:$0xff] %vm155, %v345
    %365 = vst.msk [vmem:[%s2 + $0x30] sm:$0xff] %vm155, %v346
    %366 = vst.msk [vmem:[%s2 + $0x38] sm:$0xff] %vm155, %v347
    %367 = vst.msk [vmem:[%s2 + $0x40] sm:$0xff] %vm155, %v348
    %368 = vst.msk [vmem:[%s2 + $0x48] sm:$0xff] %vm155, %v349
    %369 = vst.msk [vmem:[%s2 + $0x50] sm:$0xff] %vm155, %v350
    %370 = vst.msk [vmem:[%s2 + $0x58] sm:$0xff] %vm155, %v351
    %371 = vst.msk [vmem:[%s2 + $0x60] sm:$0xff] %vm155, %v352
    %372 = vst.msk [vmem:[%s2 + $0x68] sm:$0xff] %vm155, %v353
    %373 = vst.msk [vmem:[%s2 + $0x70] sm:$0xff] %vm155, %v354
    %374 = vst.msk [vmem:[%s2 + $0x78] sm:$0xff] %vm155, %v355
    %375 = vst.msk [vmem:[%s2 + $0x80] sm:$0xff] %vm155, %v356
    %376 = vst.msk [vmem:[%s2 + $0x88] sm:$0xff] %vm155, %v357
    %377 = vst.msk [vmem:[%s2 + $0x90] sm:$0x7] %vm335, %v358
  $region17: #{tpu_custom_call.1} parent=0 // pred_fallthru
    _
  // Predicated region
  $region18: #{tpu_custom_call.1} parent=0 // pred_check
    _
  $region19: #{tpu_custom_call.1} parent=0 // pred_check_branch
    %379 = sbr.rel (0) target = $region21
  $region20: #{tpu_custom_call.1} parent=0 // pred_region
    _
  $region21: #{tpu_custom_call.1} parent=0 // pred_fallthru
    _
  // Predicated region
  $region22: #{tpu_custom_call.1} parent=0 // pred_check
    _
  $region23: #{tpu_custom_call.1} parent=0 // pred_check_branch
    %381 = sbr.rel (0) target = $region25
  $region24: #{tpu_custom_call.1} parent=0 // pred_region
    _
  $region25: #{tpu_custom_call.1} parent=0 // pred_fallthru
    _

</llo_original>
